<compile_context>
chip_gen: v6e
topology: v6e:2x2x1
jax: 0.10.0
libtpu: 0.0.40
codegen_flags: <defaults>
</compile_context>

<pallas_src>
import jax
import jax.numpy as jnp
from jax.experimental import pallas as pl
from jax.experimental.pallas import tpu as pltpu


# ----------------------------------------------------------------------------
# Fast path: whole embedding table resident in VMEM, gather == one-hot matmul.
# ----------------------------------------------------------------------------
def _vmem_encode_kernel(w_ref, ind_ref, emb_ref, out_ref):
    """out = weighted_onehot(ind, w) @ E  (classifier = Identity)."""
    tile_b, F = w_ref.shape
    V, D = emb_ref.shape

    w = w_ref[...]                                        # [tile_b, F] f32
    ind = ind_ref[...]                                    # [tile_b, F] int32
    col = jax.lax.broadcasted_iota(jnp.int32, (tile_b, V), 1)

    # S[b, v] = sum_f w[b, f] * (ind[b, f] == v).  Padded slots (ind == 0) have
    # w == 0 (masked in the wrapper), so they contribute nothing.
    s = jnp.zeros((tile_b, V), jnp.float32)
    for f in range(F):                                    # static, small
        s = s + jnp.where(col == ind[:, f:f + 1], w[:, f:f + 1], 0.0)

    out_ref[...] = jnp.dot(
        s, emb_ref[...].astype(jnp.float32),
        preferred_element_type=jnp.float32).astype(out_ref.dtype)


def _forward_vmem_table(x_w, ind, embeddings, *, tile_b=None):
    B, F = x_w.shape
    V, D = embeddings.shape
    esize = jnp.dtype(embeddings.dtype).itemsize

    if tile_b is None:
        tile_b = min(B, 128)
        # v7x megacore: prefer >= 2 parallel batch tiles when divisibility allows.
        if B == tile_b and tile_b % 16 == 0:
            tile_b //= 2
    if B % tile_b:
        raise ValueError("B must be divisible by tile_b")

    kernel = pl.pallas_call(
        _vmem_encode_kernel,
        out_shape=jax.ShapeDtypeStruct((B, D), jnp.float32),
        grid=(B // tile_b,),
        in_specs=[
            pl.BlockSpec((tile_b, F), lambda i: (i, 0)),   # weights
            pl.BlockSpec((tile_b, F), lambda i: (i, 0)),   # indices
            pl.BlockSpec((V, D), lambda i: (0, 0)),        # whole table in VMEM
        ],
        out_specs=pl.BlockSpec((tile_b, D), lambda i: (i, 0)),
        compiler_params=pltpu.CompilerParams(
            dimension_semantics=("parallel",)),
        cost_estimate=pl.CostEstimate(
            flops=2 * B * V * D + 2 * B * F * V,
            transcendentals=0,
            bytes_accessed=V * D * esize + B * F * 8 + B * D * 4),
    )
    return kernel(x_w, ind, embeddings)


# ----------------------------------------------------------------------------
# General path: embedding table stays in HBM, rows gathered with manual DMAs.
# ----------------------------------------------------------------------------
def _gather_encode_kernel(ind_smem, w_ref, emb_hbm, out_ref, rows_buf, sems):
    """out[b] = sum_f w[b, f] * E[ind[b*F + f]]   (classifier = Identity).

    ind_smem : [B*F] int32 in SMEM (scalar prefetch, FLATTENED so SMEM is not
               padded [B, 8] -> [B, 128]).
    w_ref    : [tile_b, F] f32 VMEM - feature weights for this batch tile.
    emb_hbm  : [V, D] embedding table left in HBM (pl.ANY).
    out_ref  : [tile_b, D] VMEM output tile (lane-dense).
    rows_buf : [2, F, chunk, D] VMEM - double-buffered gathered rows.
    sems     : [2] DMA semaphores    - one per buffer slot.
    """
    tile_i = pl.program_id(0)
    tile_b, F = w_ref.shape
    _, _, chunk, D = rows_buf.shape
    n_chunks = tile_b // chunk

    def start_gather(chunk_idx, slot):
        # chunk*F row DMAs: E[ind[...]] -> rows_buf[slot, f, c]; all copies of
        # one chunk signal the same per-slot semaphore.
        base = (tile_i * tile_b + chunk_idx * chunk) * F
        for c in range(chunk):             # static
            for f in range(F):             # static
                row = ind_smem[base + c * F + f]
                pltpu.make_async_copy(
                    emb_hbm.at[pl.ds(row, 1)],            # [1, D] in HBM
                    rows_buf.at[slot, f, pl.ds(c, 1)],    # [1, D] in VMEM
                    sems.at[slot],
                ).start()
        # TODO(synk): skip DMAs for padding slots (ind == 0); requires explicit
        # per-slot copy-count accounting instead of the whole-buffer wait below.

    def wait_gather(slot):
        # The slot's copies together move exactly rows_buf[slot].size bytes, so
        # a wait whose dst is the whole slot waits for precisely those bytes.
        pltpu.make_async_copy(
            rows_buf.at[slot], rows_buf.at[slot], sems.at[slot]
        ).wait()

    # Prime the pipeline with the first chunk of this batch tile.
    start_gather(0, 0)

    def body(chunk_idx, carry):
        slot = chunk_idx & 1

        # Issue the NEXT chunk's gather BEFORE stalling on the current slot so
        # the DMA queue stays full during the wait. rows_buf[1 - slot] was
        # fully consumed in the previous iteration, so overwriting is safe.
        @pl.when(chunk_idx + 1 < n_chunks)
        def _():
            start_gather(chunk_idx + 1, 1 - slot)

        wait_gather(slot)

        start = pl.multiple_of(chunk_idx * chunk, chunk)
        w_chunk = w_ref[pl.ds(start, chunk), :].astype(jnp.float32)   # [chunk, F]

        acc = jnp.zeros((chunk, D), jnp.float32)
        for f in range(F):                                            # static, small
            rows_f = rows_buf[slot, f].astype(jnp.float32)            # [chunk, D]
            acc = acc + w_chunk[:, f:f + 1] * rows_f                  # lane broadcast

        out_ref[pl.ds(start, chunk), :] = acc.astype(out_ref.dtype)
        return carry

    jax.lax.fori_loop(0, n_chunks, body, 0)


def _forward_hbm_gather(x_w, ind, embeddings, *, tile_b=None, chunk=32):
    B, F = x_w.shape
    V, D = embeddings.shape
    esize = jnp.dtype(embeddings.dtype).itemsize

    chunk = min(chunk, B, 128)
    if tile_b is None:
        tile_b = min(B, 128)
        # v7x megacore: prefer >= 2 parallel batch tiles when possible.
        if B == tile_b and tile_b % (2 * chunk) == 0:
            tile_b //= 2
    chunk = min(chunk, tile_b)
    if B % tile_b or tile_b % chunk:
        raise ValueError("B must be divisible by tile_b, tile_b by chunk")

    ind_flat = ind.reshape(-1)             # 1D SMEM prefetch: no lane padding

    kernel = pl.pallas_call(
        _gather_encode_kernel,
        out_shape=jax.ShapeDtypeStruct((B, D), jnp.float32),
        grid_spec=pltpu.PrefetchScalarGridSpec(
            num_scalar_prefetch=1,                         # ind_flat -> SMEM
            grid=(B // tile_b,),
            in_specs=[
                pl.BlockSpec((tile_b, F), lambda i, ind_ref: (i, 0)),  # weights
                pl.BlockSpec(memory_space=pl.ANY),         # table stays in HBM
            ],
            out_specs=pl.BlockSpec((tile_b, D), lambda i, ind_ref: (i, 0)),
            scratch_shapes=[
                pltpu.VMEM((2, F, chunk, D), embeddings.dtype),  # gathered rows
                pltpu.SemaphoreType.DMA((2,)),                    # per-slot sems
            ],
        ),
        compiler_params=pltpu.CompilerParams(
            dimension_semantics=("parallel",)),
        cost_estimate=pl.CostEstimate(
            flops=2 * B * F * D,
            transcendentals=0,
            bytes_accessed=B * F * D * esize + B * D * 4 + B * F * 8),
    )
    return kernel(ind_flat, x_w, embeddings)


# ----------------------------------------------------------------------------
# Public wrapper: DeepXMLBase.forward for sparse features.
# ----------------------------------------------------------------------------
def deepxml_forward(x_weights, x_ind, embeddings, *, tile_b=None, chunk=32,
                    use_vmem_table=None):
    """out[b] = sum_f X[b, f] * E[X_ind[b, f]]; classifier = Identity."""
    B, F = x_weights.shape
    V, D = embeddings.shape
    esize = jnp.dtype(embeddings.dtype).itemsize

    # nn.Embedding(padding_idx=0): padded slots contribute zero even if row 0
    # of the table is nonzero.
    x_w = jnp.where(x_ind == 0, jnp.zeros_like(x_weights),
                    x_weights).astype(jnp.float32)
    # Clamp so a bad index cannot trigger an OOB DMA (torch would raise).
    ind = jnp.clip(x_ind, 0, V - 1).astype(jnp.int32)

    if use_vmem_table is None:
        use_vmem_table = (V * D * esize) <= (8 << 20) and V <= 8192

    if use_vmem_table:
        return _forward_vmem_table(x_w, ind, embeddings, tile_b=tile_b)
    return _forward_hbm_gather(x_w, ind, embeddings, tile_b=tile_b, chunk=chunk)


if __name__ == "__main__":
    key = jax.random.PRNGKey(0)
    k_emb, k_w, k_ind, k_emb2, k_w2, k_ind2 = jax.random.split(key, 6)

    # ---- Path 1: small vocabulary -> VMEM-resident one-hot @ table (MXU) ----
    B1, F1, V1, D1 = 8, 8, 64, 128
    emb1 = jax.random.normal(k_emb, (V1, D1), dtype=jnp.float32) * 0.02
    emb1 = emb1.at[0].set(0.0)                 # padding_idx row
    w1 = jax.random.uniform(k_w, (B1, F1), dtype=jnp.float32)
    i1 = jax.random.randint(k_ind, (B1, F1), minval=0, maxval=V1, dtype=jnp.int32)

    out1 = jax.block_until_ready(deepxml_forward(w1, i1, emb1))
    ref1 = jnp.einsum("bf,bfd->bd", jnp.where(i1 == 0, 0.0, w1), emb1[i1])
    assert out1.shape == (B1, D1)
    assert jnp.allclose(out1, ref1, atol=1e-4, rtol=1e-4), float(
        jnp.max(jnp.abs(out1 - ref1)))

    # ---- Path 2: HBM row-gather with issue-before-wait double buffering ----
    B2, F2, V2, D2 = 128, 8, 512, 128
    emb2 = jax.random.normal(k_emb2, (V2, D2), dtype=jnp.float32) * 0.02
    emb2 = emb2.at[0].set(0.0)
    w2 = jax.random.uniform(k_w2, (B2, F2), dtype=jnp.float32)
    i2 = jax.random.randint(k_ind2, (B2, F2), minval=0, maxval=V2, dtype=jnp.int32)

    out2 = jax.block_until_ready(
        deepxml_forward(w2, i2, emb2, use_vmem_table=False))
    ref2 = jnp.einsum("bf,bfd->bd", jnp.where(i2 == 0, 0.0, w2), emb2[i2])
    assert out2.shape == (B2, D2)
    assert jnp.allclose(out2, ref2, atol=1e-4, rtol=1e-4), float(
        jnp.max(jnp.abs(out2 - ref2)))

    print("KERNEL_OK")
</pallas_src>

<mosaic_0001>
module attributes {stable_mosaic.version = 11 : i64} {
  func.func @_vmem_encode_kernel(%arg0: i32, %arg1: memref<8x8xf32, #tpu.memory_space<vmem>>, %arg2: memref<8x8xi32, #tpu.memory_space<vmem>>, %arg3: memref<64x128xf32, #tpu.memory_space<vmem>>, %arg4: memref<8x128xf32, #tpu.memory_space<vmem>>) attributes {dimension_semantics = [#tpu.dimension_semantics<parallel>], iteration_bounds = array<i64: 1>, scalar_prefetch = 0 : i64, scratch_operands = 0 : i64, tpu.core_type = #tpu.core_type<tc>, window_params = [{transform_indices = @transform_0, window_bounds = array<i64: 8, 8>}, {transform_indices = @transform_1, window_bounds = array<i64: 8, 8>}, {pipeline_mode = #tpu.pipeline_mode<synchronous>, transform_indices = @transform_2, window_bounds = array<i64: 64, 128>}, {transform_indices = @transform_3, window_bounds = array<i64: 8, 128>}]} {
    %c0 = arith.constant 0 : index
    %c0_0 = arith.constant 0 : index
    %0 = vector.load %arg1[%c0, %c0_0] : memref<8x8xf32, #tpu.memory_space<vmem>>, vector<8x8xf32>
    %c0_1 = arith.constant 0 : index
    %c0_2 = arith.constant 0 : index
    %1 = vector.load %arg2[%c0_1, %c0_2] : memref<8x8xi32, #tpu.memory_space<vmem>>, vector<8x8xi32>
    %2 = tpu.iota {dimensions = array<i32: 1>} : vector<8x64xi32>
    %cst = arith.constant 0.000000e+00 : f32
    %3 = vector.broadcast %cst : f32 to vector<8x64xf32>
    %4 = vector.extract_strided_slice %1 {offsets = [0, 0], sizes = [8, 1], strides = [1, 1]} : vector<8x8xi32> to vector<8x1xi32>
    %5 = vector.broadcast %4 : vector<8x1xi32> to vector<8x64xi32>
    %6 = arith.cmpi eq, %2, %5 : vector<8x64xi32>
    %7 = vector.extract_strided_slice %0 {offsets = [0, 0], sizes = [8, 1], strides = [1, 1]} : vector<8x8xf32> to vector<8x1xf32>
    %cst_3 = arith.constant 0.000000e+00 : f32
    %8 = vector.shape_cast %7 : vector<8x1xf32> to vector<8x1xf32>
    %9 = vector.broadcast %8 : vector<8x1xf32> to vector<8x64xf32>
    %10 = vector.broadcast %cst_3 : f32 to vector<8x64xf32>
    %11 = arith.select %6, %9, %10 : vector<8x64xi1>, vector<8x64xf32>
    %12 = arith.addf %3, %11 : vector<8x64xf32>
    %13 = vector.extract_strided_slice %1 {offsets = [0, 1], sizes = [8, 1], strides = [1, 1]} : vector<8x8xi32> to vector<8x1xi32>
    %14 = vector.broadcast %13 : vector<8x1xi32> to vector<8x64xi32>
    %15 = arith.cmpi eq, %2, %14 : vector<8x64xi32>
    %16 = vector.extract_strided_slice %0 {offsets = [0, 1], sizes = [8, 1], strides = [1, 1]} : vector<8x8xf32> to vector<8x1xf32>
    %cst_4 = arith.constant 0.000000e+00 : f32
    %17 = vector.shape_cast %16 : vector<8x1xf32> to vector<8x1xf32>
    %18 = vector.broadcast %17 : vector<8x1xf32> to vector<8x64xf32>
    %19 = vector.broadcast %cst_4 : f32 to vector<8x64xf32>
    %20 = arith.select %15, %18, %19 : vector<8x64xi1>, vector<8x64xf32>
    %21 = arith.addf %12, %20 : vector<8x64xf32>
    %22 = vector.extract_strided_slice %1 {offsets = [0, 2], sizes = [8, 1], strides = [1, 1]} : vector<8x8xi32> to vector<8x1xi32>
    %23 = vector.broadcast %22 : vector<8x1xi32> to vector<8x64xi32>
    %24 = arith.cmpi eq, %2, %23 : vector<8x64xi32>
    %25 = vector.extract_strided_slice %0 {offsets = [0, 2], sizes = [8, 1], strides = [1, 1]} : vector<8x8xf32> to vector<8x1xf32>
    %cst_5 = arith.constant 0.000000e+00 : f32
    %26 = vector.shape_cast %25 : vector<8x1xf32> to vector<8x1xf32>
    %27 = vector.broadcast %26 : vector<8x1xf32> to vector<8x64xf32>
    %28 = vector.broadcast %cst_5 : f32 to vector<8x64xf32>
    %29 = arith.select %24, %27, %28 : vector<8x64xi1>, vector<8x64xf32>
    %30 = arith.addf %21, %29 : vector<8x64xf32>
    %31 = vector.extract_strided_slice %1 {offsets = [0, 3], sizes = [8, 1], strides = [1, 1]} : vector<8x8xi32> to vector<8x1xi32>
    %32 = vector.broadcast %31 : vector<8x1xi32> to vector<8x64xi32>
    %33 = arith.cmpi eq, %2, %32 : vector<8x64xi32>
    %34 = vector.extract_strided_slice %0 {offsets = [0, 3], sizes = [8, 1], strides = [1, 1]} : vector<8x8xf32> to vector<8x1xf32>
    %cst_6 = arith.constant 0.000000e+00 : f32
    %35 = vector.shape_cast %34 : vector<8x1xf32> to vector<8x1xf32>
    %36 = vector.broadcast %35 : vector<8x1xf32> to vector<8x64xf32>
    %37 = vector.broadcast %cst_6 : f32 to vector<8x64xf32>
    %38 = arith.select %33, %36, %37 : vector<8x64xi1>, vector<8x64xf32>
    %39 = arith.addf %30, %38 : vector<8x64xf32>
    %40 = vector.extract_strided_slice %1 {offsets = [0, 4], sizes = [8, 1], strides = [1, 1]} : vector<8x8xi32> to vector<8x1xi32>
    %41 = vector.broadcast %40 : vector<8x1xi32> to vector<8x64xi32>
    %42 = arith.cmpi eq, %2, %41 : vector<8x64xi32>
    %43 = vector.extract_strided_slice %0 {offsets = [0, 4], sizes = [8, 1], strides = [1, 1]} : vector<8x8xf32> to vector<8x1xf32>
    %cst_7 = arith.constant 0.000000e+00 : f32
    %44 = vector.shape_cast %43 : vector<8x1xf32> to vector<8x1xf32>
    %45 = vector.broadcast %44 : vector<8x1xf32> to vector<8x64xf32>
    %46 = vector.broadcast %cst_7 : f32 to vector<8x64xf32>
    %47 = arith.select %42, %45, %46 : vector<8x64xi1>, vector<8x64xf32>
    %48 = arith.addf %39, %47 : vector<8x64xf32>
    %49 = vector.extract_strided_slice %1 {offsets = [0, 5], sizes = [8, 1], strides = [1, 1]} : vector<8x8xi32> to vector<8x1xi32>
    %50 = vector.broadcast %49 : vector<8x1xi32> to vector<8x64xi32>
    %51 = arith.cmpi eq, %2, %50 : vector<8x64xi32>
    %52 = vector.extract_strided_slice %0 {offsets = [0, 5], sizes = [8, 1], strides = [1, 1]} : vector<8x8xf32> to vector<8x1xf32>
    %cst_8 = arith.constant 0.000000e+00 : f32
    %53 = vector.shape_cast %52 : vector<8x1xf32> to vector<8x1xf32>
    %54 = vector.broadcast %53 : vector<8x1xf32> to vector<8x64xf32>
    %55 = vector.broadcast %cst_8 : f32 to vector<8x64xf32>
    %56 = arith.select %51, %54, %55 : vector<8x64xi1>, vector<8x64xf32>
    %57 = arith.addf %48, %56 : vector<8x64xf32>
    %58 = vector.extract_strided_slice %1 {offsets = [0, 6], sizes = [8, 1], strides = [1, 1]} : vector<8x8xi32> to vector<8x1xi32>
    %59 = vector.broadcast %58 : vector<8x1xi32> to vector<8x64xi32>
    %60 = arith.cmpi eq, %2, %59 : vector<8x64xi32>
    %61 = vector.extract_strided_slice %0 {offsets = [0, 6], sizes = [8, 1], strides = [1, 1]} : vector<8x8xf32> to vector<8x1xf32>
    %cst_9 = arith.constant 0.000000e+00 : f32
    %62 = vector.shape_cast %61 : vector<8x1xf32> to vector<8x1xf32>
    %63 = vector.broadcast %62 : vector<8x1xf32> to vector<8x64xf32>
    %64 = vector.broadcast %cst_9 : f32 to vector<8x64xf32>
    %65 = arith.select %60, %63, %64 : vector<8x64xi1>, vector<8x64xf32>
    %66 = arith.addf %57, %65 : vector<8x64xf32>
    %67 = vector.extract_strided_slice %1 {offsets = [0, 7], sizes = [8, 1], strides = [1, 1]} : vector<8x8xi32> to vector<8x1xi32>
    %68 = vector.broadcast %67 : vector<8x1xi32> to vector<8x64xi32>
    %69 = arith.cmpi eq, %2, %68 : vector<8x64xi32>
    %70 = vector.extract_strided_slice %0 {offsets = [0, 7], sizes = [8, 1], strides = [1, 1]} : vector<8x8xf32> to vector<8x1xf32>
    %cst_10 = arith.constant 0.000000e+00 : f32
    %71 = vector.shape_cast %70 : vector<8x1xf32> to vector<8x1xf32>
    %72 = vector.broadcast %71 : vector<8x1xf32> to vector<8x64xf32>
    %73 = vector.broadcast %cst_10 : f32 to vector<8x64xf32>
    %74 = arith.select %69, %72, %73 : vector<8x64xi1>, vector<8x64xf32>
    %75 = arith.addf %66, %74 : vector<8x64xf32>
    %c0_11 = arith.constant 0 : index
    %c0_12 = arith.constant 0 : index
    %76 = vector.load %arg3[%c0_11, %c0_12] : memref<64x128xf32, #tpu.memory_space<vmem>>, vector<64x128xf32>
    %cst_13 = arith.constant dense<0.000000e+00> : vector<8x128xf32>
    %77 = tpu.matmul %75, %76, %cst_13 {dimension_numbers = #tpu.dot_dimension_numbers<[1], [0], [0], [1], [0, 0, 1, 1], [], []>} : vector<8x64xf32>, vector<64x128xf32>, vector<8x128xf32> -> vector<8x128xf32>
    %c0_14 = arith.constant 0 : index
    %c0_15 = arith.constant 0 : index
    %78 = vector.load %arg4[%c0_14, %c0_15] : memref<8x128xf32, #tpu.memory_space<vmem>>, vector<8x128xf32>
    tpu.vector_store %arg4[%c0_14, %c0_15], %77 {strides = array<i32>} : memref<8x128xf32, #tpu.memory_space<vmem>>, vector<8x128xf32>,
    return
  }
  func.func @transform_0(%arg0: i32) -> (i32, i32) {
    %c0_i32 = arith.constant 0 : i32
    %c0_i32_0 = arith.constant 0 : i32
    return %arg0, %c0_i32 : i32, i32
  }
  func.func @transform_1(%arg0: i32) -> (i32, i32) {
    %c0_i32 = arith.constant 0 : i32
    %c0_i32_0 = arith.constant 0 : i32
    return %arg0, %c0_i32 : i32, i32
  }
  func.func @transform_2(%arg0: i32) -> (i32, i32) {
    %c0_i32 = arith.constant 0 : i32
    %c0_i32_0 = arith.constant 0 : i32
    %c0_i32_1 = arith.constant 0 : i32
    return %c0_i32, %c0_i32_0 : i32, i32
  }
  func.func @transform_3(%arg0: i32) -> (i32, i32) {
    %c0_i32 = arith.constant 0 : i32
    %c0_i32_0 = arith.constant 0 : i32
    return %arg0, %c0_i32 : i32, i32
  }
}

</mosaic_0001>

<llo_original>
// kernel: tpu_custom_call.1
$region0: #{tpu_custom_call.1}
  #allocation0 [shape = 'u32[]', space=smem, size = 0x4, offset = 0x4, fixed_abs, tag = 'smem constant byte address 0x4 - core index']
  #allocation1 [shape = 'u32[144,128]{1,0:T(1,128)}', space=vmem, size = 0x12000, scoped, tag = 'internal scratch']
  %s0 = inlined_call_operand.hbm [shape: f32[8,8], index: 0, kind: input, shape index: {}]
  %s1 = inlined_call_operand.hbm [shape: s32[8,8], index: 1, kind: input, shape index: {}]
  %s2 = inlined_call_operand.hbm [shape: f32[64,128], index: 2, kind: input, shape index: {}]
  %s3 = inlined_call_operand.hbm [shape: f32[8,128], index: 3, kind: output, shape index: {}]
  %s4 = sld [smem:[#allocation0]]
  $region34: #{tpu_custom_call.1} parent=0
    _
  %s6 = ssub.s32 1, %s4
  %s7 = scalar_select 0, %s6, %s4
  $region1: #{tpu_custom_call.1} parent=0
    #allocation2 [shape = 'u8[4096]{0}', space=vmem, size = 0x1000, scoped, tag = 'input window, operand 0, single buffered']
    #allocation3 [shape = 's32[1]{0}', space=sflag, size = 0x4, scoped, tag = 'scoped memory for tpu_custom_call.1']
    #allocation4 [shape = 's32[1]{0}', space=sflag, size = 0x4, scoped, tag = 'scoped memory for tpu_custom_call.1']
    #allocation5 [shape = 'u8[4096]{0}', space=vmem, size = 0x1000, scoped, tag = 'input window, operand 1, single buffered']
    #allocation6 [shape = 's32[1]{0}', space=sflag, size = 0x4, scoped, tag = 'scoped memory for tpu_custom_call.1']
    #allocation7 [shape = 'u8[32768]{0}', space=vmem, size = 0x8000, scoped, tag = 'input window, operand 2, single buffered']
    #allocation8 [shape = 'u8[4096]{0}', space=vmem, size = 0x1000, scoped, tag = 'output window, operand 0, single buffered']
    %8 = vsyncpa [#allocation3], 0
    %9 = vsyncpa [#allocation6], 0
    %10 = vsyncpa [#allocation4], 0
    // Predicated region
    $region2: #{tpu_custom_call.1} parent=1 // pred_check
      _
    $region3: #{tpu_custom_call.1} parent=1 // pred_check_branch
      %12 = sbr.rel (0) target = $region5
    $region4: #{tpu_custom_call.1} parent=1 // pred_region
      %s14 = ssub.s32 128, 128
      %15 = vsyncadd [#allocation3], %s14
      %s17 = sshll.u32 [#allocation2], 4
      %s18 = int_to_ptr.vmem [resolvable:$true] %s17
      %20 = dma.hbm_to_vmem [thread:$0]  %s0, 128, %s18, [#allocation3]
    $region5: #{tpu_custom_call.1} parent=1 // pred_fallthru
      _
    // Predicated region
    $region6: #{tpu_custom_call.1} parent=1 // pred_check
      _
    $region7: #{tpu_custom_call.1} parent=1 // pred_check_branch
      %22 = sbr.rel (0) target = $region9
    $region8: #{tpu_custom_call.1} parent=1 // pred_region
      %s24 = ssub.s32 128, 128
      %25 = vsyncadd [#allocation6], %s24
      %s27 = sshll.u32 [#allocation5], 4
      %s28 = int_to_ptr.vmem [resolvable:$true] %s27
      %30 = dma.hbm_to_vmem [thread:$0]  %s1, 128, %s28, [#allocation6]
    $region9: #{tpu_custom_call.1} parent=1 // pred_fallthru
      _
    // Predicated region
    $region10: #{tpu_custom_call.1} parent=1 // pred_check
      _
    $region11: #{tpu_custom_call.1} parent=1 // pred_check_branch
      %32 = sbr.rel (0) target = $region13
    $region12: #{tpu_custom_call.1} parent=1 // pred_region
      %s34 = ssub.s32 1024, 1024
      %35 = vsyncadd [#allocation6], %s34
      %s36 = sshll.u32 [#allocation7], 4
      %s37 = int_to_ptr.vmem [resolvable:$true] %s36
      %42 = dma.hbm_to_vmem [thread:$0]  %s2, 1024, %s37, [#allocation6], 128, 128, 8
    $region13: #{tpu_custom_call.1} parent=1 // pred_fallthru
      _
    // Predicated region
    $region14: #{tpu_custom_call.1} parent=1 // pred_check
      _
    $region15: #{tpu_custom_call.1} parent=1 // pred_check_branch
      %44 = sbr.rel (0) target = $region17
    $region16: #{tpu_custom_call.1} parent=1 // pred_region
      %45 = dma.done [#allocation3], 128
    $region17: #{tpu_custom_call.1} parent=1 // pred_fallthru
      _
    // Predicated region
    $region18: #{tpu_custom_call.1} parent=1 // pred_check
      _
    $region19: #{tpu_custom_call.1} parent=1 // pred_check_branch
      %47 = sbr.rel (0) target = $region21
    $region20: #{tpu_custom_call.1} parent=1 // pred_region
      %48 = dma.done [#allocation6], 128
    $region21: #{tpu_custom_call.1} parent=1 // pred_fallthru
      _
    // Predicated region
    $region22: #{tpu_custom_call.1} parent=1 // pred_check
      _
    $region23: #{tpu_custom_call.1} parent=1 // pred_check_branch
      %50 = sbr.rel (0) target = $region25
    $region24: #{tpu_custom_call.1} parent=1 // pred_region
      %51 = dma.done [#allocation6], 1024
    $region25: #{tpu_custom_call.1} parent=1 // pred_fallthru
      _
    %v52 = vld [vmem:[#allocation2] sm:$0xff]
    %v53 = vld [vmem:[#allocation5] sm:$0xff]
    %v54 = vlaneseq
    %v55 = vand.u32 %v54, 127
    %56 = vset.pattern.permute.xlu0 0
    %57 = vperm.xlu0 %56, %v53
    %v58 = vpop.permute.xlu0 %57
    %vm59 = vcmp.eq.s32.totalorder %v55, %v58
    %61 = vset.pattern.permute.xlu0 0
    %62 = vperm.xlu0 %61, %v52
    %v63 = vpop.permute.xlu0 %62
    %v65 = vsel %vm59, %v63, 0.0
    %v66 = vadd.f32 %v65, 0.0
    %67 = vset.pattern.permute.xlu0 1
    %68 = vperm.xlu0 %67, %v53
    %v69 = vpop.permute.xlu0 %68
    %vm70 = vcmp.eq.s32.totalorder %v55, %v69
    %71 = vset.pattern.permute.xlu0 1
    %72 = vperm.xlu0 %71, %v52
    %v73 = vpop.permute.xlu0 %72
    %v75 = vsel %vm70, %v73, 0.0
    %v76 = vadd.f32 %v66, %v75
    %77 = vset.pattern.permute.xlu0 2
    %78 = vperm.xlu0 %77, %v53
    %v79 = vpop.permute.xlu0 %78
    %vm80 = vcmp.eq.s32.totalorder %v55, %v79
    %81 = vset.pattern.permute.xlu0 2
    %82 = vperm.xlu0 %81, %v52
    %v83 = vpop.permute.xlu0 %82
    %v85 = vsel %vm80, %v83, 0.0
    %v86 = vadd.f32 %v76, %v85
    %87 = vset.pattern.permute.xlu0 3
    %88 = vperm.xlu0 %87, %v53
    %v89 = vpop.permute.xlu0 %88
    %vm90 = vcmp.eq.s32.totalorder %v55, %v89
    %91 = vset.pattern.permute.xlu0 3
    %92 = vperm.xlu0 %91, %v52
    %v93 = vpop.permute.xlu0 %92
    %v95 = vsel %vm90, %v93, 0.0
    %v96 = vadd.f32 %v86, %v95
    %97 = vset.pattern.permute.xlu0 4
    %98 = vperm.xlu0 %97, %v53
    %v99 = vpop.permute.xlu0 %98
    %vm100 = vcmp.eq.s32.totalorder %v55, %v99
    %101 = vset.pattern.permute.xlu0 4
    %102 = vperm.xlu0 %101, %v52
    %v103 = vpop.permute.xlu0 %102
    %v105 = vsel %vm100, %v103, 0.0
    %v106 = vadd.f32 %v96, %v105
    %107 = vset.pattern.permute.xlu0 5
    %108 = vperm.xlu0 %107, %v53
    %v109 = vpop.permute.xlu0 %108
    %vm110 = vcmp.eq.s32.totalorder %v55, %v109
    %111 = vset.pattern.permute.xlu0 5
    %112 = vperm.xlu0 %111, %v52
    %v113 = vpop.permute.xlu0 %112
    %v115 = vsel %vm110, %v113, 0.0
    %v116 = vadd.f32 %v106, %v115
    %117 = vset.pattern.permute.xlu0 6
    %118 = vperm.xlu0 %117, %v53
    %v119 = vpop.permute.xlu0 %118
    %vm120 = vcmp.eq.s32.totalorder %v55, %v119
    %121 = vset.pattern.permute.xlu0 6
    %122 = vperm.xlu0 %121, %v52
    %v123 = vpop.permute.xlu0 %122
    %v125 = vsel %vm120, %v123, 0.0
    %v126 = vadd.f32 %v116, %v125
    %127 = vset.pattern.permute.xlu0 7
    %128 = vperm.xlu0 %127, %v53
    %v129 = vpop.permute.xlu0 %128
    %vm130 = vcmp.eq.s32.totalorder %v55, %v129
    %131 = vset.pattern.permute.xlu0 7
    %132 = vperm.xlu0 %131, %v52
    %v133 = vpop.permute.xlu0 %132
    %v135 = vsel %vm130, %v133, 0.0
    %v136 = vadd.f32 %v126, %v135
    %v137 = vld [vmem:[#allocation7] sm:$0xff]
    %v138 = vld [vmem:[#allocation7 + $0x8] sm:$0xff]
    %v139 = vld [vmem:[#allocation7 + $0x10] sm:$0xff]
    %v140 = vld [vmem:[#allocation7 + $0x18] sm:$0xff]
    %v141 = vld [vmem:[#allocation7 + $0x20] sm:$0xff]
    %v142 = vld [vmem:[#allocation7 + $0x28] sm:$0xff]
    %v143 = vld [vmem:[#allocation7 + $0x30] sm:$0xff]
    %v144 = vld [vmem:[#allocation7 + $0x38] sm:$0xff]
    %vm145 = vcmask 523264
    %v147 = vsel %vm145, %v136, 0
    %149 = vmatprep.subr.mxu0 0.0
    %150 = vmatpush1.msra.mxu0 0.0
    %151 = vmatprep.subr.mxu0 0.0
    %152 = vmatpush1.msra.mxu0 0.0
    %153 = vmatprep.subr.mxu0 0.0
    %154 = vmatpush1.msra.mxu0 0.0
    %155 = vmatprep.subr.mxu0 0.0
    %156 = vmatpush1.msra.mxu0 0.0
    %157 = vmatprep.subr.mxu0 0.0
    %158 = vmatpush1.msra.mxu0 0.0
    %159 = vmatprep.subr.mxu0 0.0
    %160 = vmatpush1.msra.mxu0 0.0
    %161 = vmatprep.subr.mxu0 0.0
    %162 = vmatpush1.msra.mxu0 0.0
    %163 = vmatprep.subr.mxu0 0.0
    %164 = vmatpush1.msra.mxu0 0.0
    %165 = vmatprep.subr.mxu0 0.0
    %166 = vmatpush1.msra.mxu0 %v144
    %167 = vmatprep.subr.mxu0 0.0
    %168 = vmatpush1.msra.mxu0 %v143
    %169 = vmatprep.subr.mxu0 0.0
    %170 = vmatpush1.msra.mxu0 %v142
    %171 = vmatprep.subr.mxu0 0.0
    %172 = vmatpush1.msra.mxu0 %v141
    %173 = vmatprep.subr.mxu0 0.0
    %174 = vmatpush1.msra.mxu0 %v140
    %175 = vmatprep.subr.mxu0 0.0
    %176 = vmatpush1.msra.mxu0 %v139
    %177 = vmatprep.subr.mxu0 0.0
    %178 = vmatpush1.msra.mxu0 %v138
    %179 = vmatprep.subr.mxu0 0.0
    %180 = vmatpush1.msra.mxu0 %v137
    %181 = vmatprep.subr.mxu0 0.0
    %182 = vmatpush2.msra.mxu0 0.0
    %183 = vmatprep.subr.mxu0 0.0
    %184 = vmatpush2.msra.mxu0 0.0
    %185 = vmatprep.subr.mxu0 0.0
    %186 = vmatpush2.msra.mxu0 0.0
    %187 = vmatprep.subr.mxu0 0.0
    %188 = vmatpush2.msra.mxu0 0.0
    %189 = vmatprep.subr.mxu0 0.0
    %190 = vmatpush2.msra.mxu0 0.0
    %191 = vmatprep.subr.mxu0 0.0
    %192 = vmatpush2.msra.mxu0 0.0
    %193 = vmatprep.subr.mxu0 0.0
    %194 = vmatpush2.msra.mxu0 0.0
    %195 = vmatprep.subr.mxu0 0.0
    %196 = vmatpush2.msra.mxu0 0.0
    %197 = vmatprep.subr.mxu0 0.0
    %198 = vmatpush2.msra.mxu0 0.0
    %199 = vmatprep.subr.mxu0 0.0
    %200 = vmatpush2.msra.mxu0 0.0
    %201 = vmatprep.subr.mxu0 0.0
    %202 = vmatpush2.msra.mxu0 0.0
    %203 = vmatprep.subr.mxu0 0.0
    %204 = vmatpush2.msra.mxu0 0.0
    %205 = vmatprep.subr.mxu0 0.0
    %206 = vmatpush2.msra.mxu0 0.0
    %207 = vmatprep.subr.mxu0 0.0
    %208 = vmatpush2.msra.mxu0 0.0
    %209 = vmatprep.subr.mxu0 0.0
    %210 = vmatpush2.msra.mxu0 0.0
    %211 = vmatprep.subr.mxu0 0.0
    %212 = vmatpush2.msra.mxu0 0.0
    %213 = vmatprep.mubr.f32.mxu0 0.0
    %214 = vmatmul.mubr.f32.gmra.mxu0 %v147
    %v215 = vpop.f32.mrf.mxu0
    %v216 = vadd.f32 0.0, %v215
    %v217 = vpop.f32.mrf.mxu0
    %218 = vdwg.mxu0
    %219 = vst [vmem:[#allocation8] sm:$0xff] %v216
    // Predicated region
    $region26: #{tpu_custom_call.1} parent=1 // pred_check
      _
    $region27: #{tpu_custom_call.1} parent=1 // pred_check_branch
      %221 = sbr.rel (0) target = $region29
    $region28: #{tpu_custom_call.1} parent=1 // pred_region
      %s223 = ssub.s32 128, 128
      %224 = vsyncadd [#allocation4], %s223
      %s226 = sshll.u32 [#allocation8], 4
      %s227 = int_to_ptr.vmem [resolvable:$true] %s226
      %229 = dma.vmem_to_hbm [thread:$0]  %s227, 128, %s3, [#allocation4]
    $region29: #{tpu_custom_call.1} parent=1 // pred_fallthru
      _
    // Predicated region
    $region30: #{tpu_custom_call.1} parent=1 // pred_check
      _
    $region31: #{tpu_custom_call.1} parent=1 // pred_check_branch
      %231 = sbr.rel (0) target = $region33
    $region32: #{tpu_custom_call.1} parent=1 // pred_region
      %232 = dma.done [#allocation4], 128
    $region33: #{tpu_custom_call.1} parent=1 // pred_fallthru
      _
    %233 = vsyncpa [#allocation3], 1
    %234 = vsyncpa [#allocation6], 1
    %235 = vsyncpa [#allocation4], 1

</llo_original>
